<compile_context>
chip_gen: v7x
topology: tpu7x:2x2x1
jax: 0.10.0
libtpu: 0.0.40
codegen_flags: <defaults>
</compile_context>

<pallas_src>
import functools
import math

import jax
import jax.numpy as jnp
from jax import lax
from jax.experimental import pallas as pl
from jax.experimental.pallas import tpu as pltpu


def attention_head_kernel(q_ref, k_ref, v_ref, w_ref, b_ref, o_ref,
                          m_sc, l_sc, acc_sc, qp_sc, *, pad):
    # q_ref: (1, tq, L) bf16   k_ref/v_ref: (1, tk, L) bf16
    # w_ref: (L, 3*pad) bf16 = [Wq*scale | Wk | Wv], zero-padded to `pad` lanes per segment
    # b_ref: (1, 3*pad) f32  = [bq*scale | bk | bv], padded the same way
    # o_ref: (1, tq, pad)    lane-dense output; wrapper slices [..., :head_dim]
    # scratch: m_sc/l_sc (tq,1) f32, acc_sc (tq,pad) f32, qp_sc (tq,pad) bf16
    ki = pl.program_id(2)

    @pl.when(ki == 0)
    def _init():
        # Project the resident query tile once per (b, q-tile); the 1/sqrt(head_dim)
        # scale is already folded into Wq/bq, so no per-score multiply below.
        q = jnp.dot(q_ref[0], w_ref[:, 0:pad],
                    preferred_element_type=jnp.float32) + b_ref[:, 0:pad]
        qp_sc[...] = q.astype(qp_sc.dtype)
        m_sc[...] = jnp.full_like(m_sc, -jnp.inf)
        l_sc[...] = jnp.zeros_like(l_sc)
        acc_sc[...] = jnp.zeros_like(acc_sc)

    # Project only this key/value tile (bf16 MXU operands, f32 accumulation); the packed
    # weight stays one VMEM block, each segment reads its own lane-group-aligned columns.
    k = jnp.dot(k_ref[0], w_ref[:, pad:2 * pad],
                preferred_element_type=jnp.float32) + b_ref[:, pad:2 * pad]
    v = jnp.dot(v_ref[0], w_ref[:, 2 * pad:3 * pad],
                preferred_element_type=jnp.float32) + b_ref[:, 2 * pad:3 * pad]

    # scores = (q * scale) @ k^T: contract the last dims of both operands directly
    # (no k.T / XLU transpose). Padded lanes of q/k are exactly zero.
    s = lax.dot_general(qp_sc[...], k.astype(jnp.bfloat16),
                        dimension_numbers=(((1,), (1,)), ((), ())),
                        preferred_element_type=jnp.float32)              # (tq, tk)

    # Online (flash) softmax, all f32.
    m_new = jnp.maximum(m_sc[...], jnp.max(s, axis=-1, keepdims=True))
    alpha = jnp.exp(m_sc[...] - m_new)
    p = jnp.exp(s - m_new)
    l_sc[...] = alpha * l_sc[...] + jnp.sum(p, axis=-1, keepdims=True)
    acc_sc[...] = alpha * acc_sc[...] + jnp.dot(
        p.astype(jnp.bfloat16), v.astype(jnp.bfloat16),
        preferred_element_type=jnp.float32)
    m_sc[...] = m_new

    @pl.when(ki == pl.num_programs(2) - 1)
    def _finalize():
        # Exact divide (per review): the denominator is a single lane column, so the EUP
        # approx reciprocal buys nothing here.
        o_ref[0] = (acc_sc[...] / l_sc[...]).astype(o_ref.dtype)


def _pick_tile(n, target):
    # Use `target` when it evenly divides n, otherwise fall back to the full extent so no
    # key/query padding (hence no -inf masking) is ever needed.
    # TODO(synk): support ragged Sk tiles by masking padded key columns to -inf pre-softmax.
    return target if n % target == 0 else n


def pack_params(params):
    """One-time host-side packing (out of the forward path): pad head dim to 128 lanes,
    fold 1/sqrt(head_dim) into Wq/bq, concat [Wq|Wk|Wv] column-wise, cast weights to bf16
    (biases stay f32)."""
    wq, bq, wk, bk, wv, bv = params
    H = wq.shape[1]
    P = ((H + 127) // 128) * 128
    scale = 1.0 / math.sqrt(float(H))

    def pad_lanes(a):
        return jnp.pad(a, ((0, 0), (0, P - H)))

    w_packed = jnp.concatenate(
        [pad_lanes(wq * scale), pad_lanes(wk), pad_lanes(wv)],
        axis=1).astype(jnp.bfloat16)                                   # (L, 3P)
    b_packed = jnp.concatenate(
        [pad_lanes(bq * scale), pad_lanes(bk), pad_lanes(bv)],
        axis=1).astype(jnp.float32)                                    # (1, 3P)
    return w_packed, b_packed, H, P


def attention_head(query, key, value, packed, *, tq_target=256, tk_target=512):
    """query: (B, Sq, L), key/value: (B, Sk, L) -> (B, Sq, H)."""
    w_packed, b_packed, H, P = packed
    B, Sq, L = query.shape
    _, Sk, _ = key.shape

    # Flash tile sizes: small enough that (tq, tk) f32 scores + double-buffered input
    # blocks fit comfortably under the default scoped VMEM on every generation
    # (16 MiB v5e / 32 MiB v6e-v7x), with v7x's 64 MiB physical as the hard ceiling.
    tq = _pick_tile(Sq, tq_target)
    tk = _pick_tile(Sk, tk_target)

    # bf16 MXU operands at the call boundary; accumulation & softmax stay f32 in-kernel.
    q_in = query.astype(jnp.bfloat16)
    k_in = key.astype(jnp.bfloat16)
    v_in = value.astype(jnp.bfloat16)

    kernel = functools.partial(attention_head_kernel, pad=P)

    out_padded = pl.pallas_call(
        kernel,
        out_shape=jax.ShapeDtypeStruct((B, Sq, P), query.dtype),
        grid_spec=pltpu.PrefetchScalarGridSpec(
            num_scalar_prefetch=0,
            grid=(B, Sq // tq, Sk // tk),
            in_specs=[
                pl.BlockSpec((1, tq, L), lambda b, qi, ki: (b, qi, 0)),   # query
                pl.BlockSpec((1, tk, L), lambda b, qi, ki: (b, 0, ki)),   # key
                pl.BlockSpec((1, tk, L), lambda b, qi, ki: (b, 0, ki)),   # value
                pl.BlockSpec((L, 3 * P), lambda b, qi, ki: (0, 0)),       # packed W (resident)
                pl.BlockSpec((1, 3 * P), lambda b, qi, ki: (0, 0)),       # packed b (resident)
            ],
            out_specs=pl.BlockSpec((1, tq, P), lambda b, qi, ki: (b, qi, 0)),
            scratch_shapes=[
                pltpu.VMEM((tq, 1), jnp.float32),    # m: running max
                pltpu.VMEM((tq, 1), jnp.float32),    # l: running denom
                pltpu.VMEM((tq, P), jnp.float32),    # acc: unnormalized output
                pltpu.VMEM((tq, P), jnp.bfloat16),   # projected (pre-scaled) query tile
            ]),
        compiler_params=pltpu.CompilerParams(
            # B and Sq-tile axes parallel (v7x megacore load balance); Sk is the reduction.
            dimension_semantics=("parallel", "parallel", "arbitrary"),
            # Explicit budget: above the 16/32 MiB scoped defaults, under v7x's 64 MiB physical.
            vmem_limit_bytes=48 * 1024 * 1024),
    )(q_in, k_in, v_in, w_packed, b_packed)

    # TODO(synk): when used inside a multi-head module, pack >=2 heads into the lane
    # dimension instead of zero-padding one head to 128 lanes (v6e/v7x MXU is 2x256^2).
    return out_padded[..., :H]


def init_params(key, latent_dim, head_dim):
    """Deterministic init mimicking nn.Linear defaults (uniform in +/- 1/sqrt(fan_in))."""
    ks = jax.random.split(key, 6)
    bound = 1.0 / math.sqrt(latent_dim)
    # PyTorch Linear weight is (out, in); we store it transposed as (in, out) for x @ W.
    wq = jax.random.uniform(ks[0], (latent_dim, head_dim), jnp.float32, -bound, bound)
    bq = jax.random.uniform(ks[1], (1, head_dim), jnp.float32, -bound, bound)
    wk = jax.random.uniform(ks[2], (latent_dim, head_dim), jnp.float32, -bound, bound)
    bk = jax.random.uniform(ks[3], (1, head_dim), jnp.float32, -bound, bound)
    wv = jax.random.uniform(ks[4], (latent_dim, head_dim), jnp.float32, -bound, bound)
    bv = jax.random.uniform(ks[5], (1, head_dim), jnp.float32, -bound, bound)
    return (wq, bq, wk, bk, wv, bv)


def reference(query, key, value, params):
    wq, bq, wk, bk, wv, bv = params
    q = query @ wq + bq
    k = key @ wk + bk
    v = value @ wv + bv
    scores = jnp.einsum("bqd,bkd->bqk", q, k) / math.sqrt(q.shape[-1])
    p = jax.nn.softmax(scores, axis=-1)
    return jnp.einsum("bqk,bkd->bqd", p, v)


if __name__ == "__main__":
    B, S, LATENT, HEAD = 2, 8, 32, 16
    root = jax.random.PRNGKey(0)
    kq, kk, kv, kp = jax.random.split(root, 4)

    query = jax.random.normal(kq, (B, S, LATENT), jnp.float32)
    key_in = jax.random.normal(kk, (B, S, LATENT), jnp.float32)
    value_in = jax.random.normal(kv, (B, S, LATENT), jnp.float32)
    params = init_params(kp, LATENT, HEAD)
    packed = pack_params(params)  # one-time packing, hoisted out of the forward path

    out = attention_head(query, key_in, value_in, packed)
    out = jax.block_until_ready(out)

    ref = reference(query, key_in, value_in, params)
    assert out.shape == (B, S, HEAD)
    # Tolerance reflects bf16 MXU operands (per perf review); accumulation, softmax and the
    # final division are all exact f32, so the delta vs the f32 reference stays ~1e-2.
    assert jnp.allclose(out, ref, atol=3e-2, rtol=3e-2), "mismatch vs JAX reference"

    print("KERNEL_OK")
</pallas_src>

<mosaic_0001>
module attributes {stable_mosaic.version = 11 : i64} {
  func.func @attention_head_kernel(%arg0: i32, %arg1: i32, %arg2: i32, %arg3: memref<1x8x32xbf16, #tpu.memory_space<vmem>>, %arg4: memref<1x8x32xbf16, #tpu.memory_space<vmem>>, %arg5: memref<1x8x32xbf16, #tpu.memory_space<vmem>>, %arg6: memref<32x384xbf16, #tpu.memory_space<vmem>>, %arg7: memref<1x384xf32, #tpu.memory_space<vmem>>, %arg8: memref<1x8x128xf32, #tpu.memory_space<vmem>>, %arg9: memref<8x1xf32, #tpu.memory_space<vmem>>, %arg10: memref<8x1xf32, #tpu.memory_space<vmem>>, %arg11: memref<8x128xf32, #tpu.memory_space<vmem>>, %arg12: memref<8x128xbf16, #tpu.memory_space<vmem>>) attributes {dimension_semantics = [#tpu.dimension_semantics<parallel>, #tpu.dimension_semantics<parallel>, #tpu.dimension_semantics<arbitrary>], iteration_bounds = array<i64: 2, 1, 1>, scalar_prefetch = 0 : i64, scratch_operands = 4 : i64, tpu.core_type = #tpu.core_type<tc>, window_params = [{transform_indices = @transform_0, window_bounds = array<i64: 1, 8, 32>}, {transform_indices = @transform_1, window_bounds = array<i64: 1, 8, 32>}, {transform_indices = @transform_2, window_bounds = array<i64: 1, 8, 32>}, {pipeline_mode = #tpu.pipeline_mode<synchronous>, transform_indices = @transform_3, window_bounds = array<i64: 32, 384>}, {pipeline_mode = #tpu.pipeline_mode<synchronous>, transform_indices = @transform_4, window_bounds = array<i64: 1, 384>}, {transform_indices = @transform_5, window_bounds = array<i64: 1, 8, 128>}]} {
    %c0_i32 = arith.constant 0 : i32
    %0 = arith.cmpi eq, %arg2, %c0_i32 : i32
    %1 = arith.extui %0 : i1 to i32
    %c0_i32_0 = arith.constant 0 : i32
    %2 = arith.cmpi ne, %1, %c0_i32_0 : i32
    scf.if %2 {
      %c0_35 = arith.constant 0 : index
      %c0_36 = arith.constant 0 : index
      %c0_37 = arith.constant 0 : index
      %48 = vector.load %arg3[%c0_35, %c0_36, %c0_37] : memref<1x8x32xbf16, #tpu.memory_space<vmem>>, vector<1x8x32xbf16>
      %49 = vector.shape_cast %48 : vector<1x8x32xbf16> to vector<8x32xbf16>
      %c0_38 = arith.constant 0 : index
      %c0_39 = arith.constant 0 : index
      %50 = vector.load %arg6[%c0_38, %c0_39] : memref<32x384xbf16, #tpu.memory_space<vmem>>, vector<32x128xbf16>
      %cst_40 = arith.constant dense<0.000000e+00> : vector<8x128xf32>
      %51 = tpu.matmul %49, %50, %cst_40 {dimension_numbers = #tpu.dot_dimension_numbers<[1], [0], [0], [1], [0, 0, 1, 1], [], []>} : vector<8x32xbf16>, vector<32x128xbf16>, vector<8x128xf32> -> vector<8x128xf32>
      %c0_41 = arith.constant 0 : index
      %c0_42 = arith.constant 0 : index
      %52 = vector.load %arg7[%c0_41, %c0_42] : memref<1x384xf32, #tpu.memory_space<vmem>>, vector<1x128xf32>
      %53 = vector.broadcast %52 : vector<1x128xf32> to vector<8x128xf32>
      %54 = arith.addf %51, %53 : vector<8x128xf32>
      %55 = arith.truncf %54 : vector<8x128xf32> to vector<8x128xbf16>
      %c0_43 = arith.constant 0 : index
      %c0_44 = arith.constant 0 : index
      %56 = vector.load %arg12[%c0_43, %c0_44] : memref<8x128xbf16, #tpu.memory_space<vmem>>, vector<8x128xbf16>
      tpu.vector_store %arg12[%c0_43, %c0_44], %55 {strides = array<i32>} : memref<8x128xbf16, #tpu.memory_space<vmem>>, vector<8x128xbf16>,
      %cst_45 = arith.constant 0xFF800000 : f32
      %57 = vector.broadcast %cst_45 : f32 to vector<8x1xf32>
      %c0_46 = arith.constant 0 : index
      %c0_47 = arith.constant 0 : index
      %58 = vector.load %arg9[%c0_46, %c0_47] : memref<8x1xf32, #tpu.memory_space<vmem>>, vector<8x1xf32>
      tpu.vector_store %arg9[%c0_46, %c0_47], %57 {strides = array<i32>} : memref<8x1xf32, #tpu.memory_space<vmem>>, vector<8x1xf32>,
      %cst_48 = arith.constant 0.000000e+00 : f32
      %59 = vector.broadcast %cst_48 : f32 to vector<8x1xf32>
      %c0_49 = arith.constant 0 : index
      %c0_50 = arith.constant 0 : index
      %60 = vector.load %arg10[%c0_49, %c0_50] : memref<8x1xf32, #tpu.memory_space<vmem>>, vector<8x1xf32>
      tpu.vector_store %arg10[%c0_49, %c0_50], %59 {strides = array<i32>} : memref<8x1xf32, #tpu.memory_space<vmem>>, vector<8x1xf32>,
      %cst_51 = arith.constant 0.000000e+00 : f32
      %61 = vector.broadcast %cst_51 : f32 to vector<8x128xf32>
      %c0_52 = arith.constant 0 : index
      %c0_53 = arith.constant 0 : index
      %62 = vector.load %arg11[%c0_52, %c0_53] : memref<8x128xf32, #tpu.memory_space<vmem>>, vector<8x128xf32>
      tpu.vector_store %arg11[%c0_52, %c0_53], %61 {strides = array<i32>} : memref<8x128xf32, #tpu.memory_space<vmem>>, vector<8x128xf32>,
    } else {
    }
    %c0 = arith.constant 0 : index
    %c0_1 = arith.constant 0 : index
    %c0_2 = arith.constant 0 : index
    %3 = vector.load %arg4[%c0, %c0_1, %c0_2] : memref<1x8x32xbf16, #tpu.memory_space<vmem>>, vector<1x8x32xbf16>
    %4 = vector.shape_cast %3 : vector<1x8x32xbf16> to vector<8x32xbf16>
    %c0_3 = arith.constant 0 : index
    %c128 = arith.constant 128 : index
    %5 = vector.load %arg6[%c0_3, %c128] : memref<32x384xbf16, #tpu.memory_space<vmem>>, vector<32x128xbf16>
    %cst = arith.constant dense<0.000000e+00> : vector<8x128xf32>
    %6 = tpu.matmul %4, %5, %cst {dimension_numbers = #tpu.dot_dimension_numbers<[1], [0], [0], [1], [0, 0, 1, 1], [], []>} : vector<8x32xbf16>, vector<32x128xbf16>, vector<8x128xf32> -> vector<8x128xf32>
    %c0_4 = arith.constant 0 : index
    %c128_5 = arith.constant 128 : index
    %7 = vector.load %arg7[%c0_4, %c128_5] : memref<1x384xf32, #tpu.memory_space<vmem>>, vector<1x128xf32>
    %8 = vector.broadcast %7 : vector<1x128xf32> to vector<8x128xf32>
    %9 = arith.addf %6, %8 : vector<8x128xf32>
    %c0_6 = arith.constant 0 : index
    %c0_7 = arith.constant 0 : index
    %c0_8 = arith.constant 0 : index
    %10 = vector.load %arg5[%c0_6, %c0_7, %c0_8] : memref<1x8x32xbf16, #tpu.memory_space<vmem>>, vector<1x8x32xbf16>
    %11 = vector.shape_cast %10 : vector<1x8x32xbf16> to vector<8x32xbf16>
    %c0_9 = arith.constant 0 : index
    %c256 = arith.constant 256 : index
    %12 = vector.load %arg6[%c0_9, %c256] : memref<32x384xbf16, #tpu.memory_space<vmem>>, vector<32x128xbf16>
    %cst_10 = arith.constant dense<0.000000e+00> : vector<8x128xf32>
    %13 = tpu.matmul %11, %12, %cst_10 {dimension_numbers = #tpu.dot_dimension_numbers<[1], [0], [0], [1], [0, 0, 1, 1], [], []>} : vector<8x32xbf16>, vector<32x128xbf16>, vector<8x128xf32> -> vector<8x128xf32>
    %c0_11 = arith.constant 0 : index
    %c256_12 = arith.constant 256 : index
    %14 = vector.load %arg7[%c0_11, %c256_12] : memref<1x384xf32, #tpu.memory_space<vmem>>, vector<1x128xf32>
    %15 = vector.broadcast %14 : vector<1x128xf32> to vector<8x128xf32>
    %16 = arith.addf %13, %15 : vector<8x128xf32>
    %c0_13 = arith.constant 0 : index
    %c0_14 = arith.constant 0 : index
    %17 = vector.load %arg12[%c0_13, %c0_14] : memref<8x128xbf16, #tpu.memory_space<vmem>>, vector<8x128xbf16>
    %18 = arith.truncf %9 : vector<8x128xf32> to vector<8x128xbf16>
    %cst_15 = arith.constant dense<0.000000e+00> : vector<8x8xf32>
    %19 = tpu.matmul %17, %18, %cst_15 {dimension_numbers = #tpu.dot_dimension_numbers<[1], [1], [0], [0], [0, 0, 1, 0], [], []>} : vector<8x128xbf16>, vector<8x128xbf16>, vector<8x8xf32> -> vector<8x8xf32>
    %c0_16 = arith.constant 0 : index
    %c0_17 = arith.constant 0 : index
    %20 = vector.load %arg9[%c0_16, %c0_17] : memref<8x1xf32, #tpu.memory_space<vmem>>, vector<8x1xf32>
    %cst_18 = arith.constant dense<0xFF800000> : vector<8xf32>
    %21 = vector.multi_reduction <maximumf>, %19, %cst_18 [1] : vector<8x8xf32> to vector<8xf32>
    %22 = vector.shape_cast %21 : vector<8xf32> to vector<8x1xf32>
    %23 = arith.maximumf %20, %22 : vector<8x1xf32>
    %c0_19 = arith.constant 0 : index
    %c0_20 = arith.constant 0 : index
    %24 = vector.load %arg9[%c0_19, %c0_20] : memref<8x1xf32, #tpu.memory_space<vmem>>, vector<8x1xf32>
    %25 = arith.subf %24, %23 : vector<8x1xf32>
    %26 = math.exp %25 : vector<8x1xf32>
    %27 = vector.broadcast %23 : vector<8x1xf32> to vector<8x8xf32>
    %28 = arith.subf %19, %27 : vector<8x8xf32>
    %29 = math.exp %28 : vector<8x8xf32>
    %c0_21 = arith.constant 0 : index
    %c0_22 = arith.constant 0 : index
    %30 = vector.load %arg10[%c0_21, %c0_22] : memref<8x1xf32, #tpu.memory_space<vmem>>, vector<8x1xf32>
    %31 = arith.mulf %26, %30 : vector<8x1xf32>
    %cst_23 = arith.constant dense<0.000000e+00> : vector<8xf32>
    %32 = vector.multi_reduction <add>, %29, %cst_23 [1] : vector<8x8xf32> to vector<8xf32>
    %33 = vector.shape_cast %32 : vector<8xf32> to vector<8x1xf32>
    %34 = arith.addf %31, %33 : vector<8x1xf32>
    %c0_24 = arith.constant 0 : index
    %c0_25 = arith.constant 0 : index
    %35 = vector.load %arg10[%c0_24, %c0_25] : memref<8x1xf32, #tpu.memory_space<vmem>>, vector<8x1xf32>
    tpu.vector_store %arg10[%c0_24, %c0_25], %34 {strides = array<i32>} : memref<8x1xf32, #tpu.memory_space<vmem>>, vector<8x1xf32>,
    %c0_26 = arith.constant 0 : index
    %c0_27 = arith.constant 0 : index
    %36 = vector.load %arg11[%c0_26, %c0_27] : memref<8x128xf32, #tpu.memory_space<vmem>>, vector<8x128xf32>
    %37 = vector.broadcast %26 : vector<8x1xf32> to vector<8x128xf32>
    %38 = arith.mulf %37, %36 : vector<8x128xf32>
    %39 = arith.truncf %29 : vector<8x8xf32> to vector<8x8xbf16>
    %40 = arith.truncf %16 : vector<8x128xf32> to vector<8x128xbf16>
    %cst_28 = arith.constant dense<0.000000e+00> : vector<8x128xf32>
    %41 = tpu.matmul %39, %40, %cst_28 {dimension_numbers = #tpu.dot_dimension_numbers<[1], [0], [0], [1], [0, 0, 1, 1], [], []>} : vector<8x8xbf16>, vector<8x128xbf16>, vector<8x128xf32> -> vector<8x128xf32>
    %42 = arith.addf %38, %41 : vector<8x128xf32>
    %c0_29 = arith.constant 0 : index
    %c0_30 = arith.constant 0 : index
    %43 = vector.load %arg11[%c0_29, %c0_30] : memref<8x128xf32, #tpu.memory_space<vmem>>, vector<8x128xf32>
    tpu.vector_store %arg11[%c0_29, %c0_30], %42 {strides = array<i32>} : memref<8x128xf32, #tpu.memory_space<vmem>>, vector<8x128xf32>,
    %c0_31 = arith.constant 0 : index
    %c0_32 = arith.constant 0 : index
    %44 = vector.load %arg9[%c0_31, %c0_32] : memref<8x1xf32, #tpu.memory_space<vmem>>, vector<8x1xf32>
    tpu.vector_store %arg9[%c0_31, %c0_32], %23 {strides = array<i32>} : memref<8x1xf32, #tpu.memory_space<vmem>>, vector<8x1xf32>,
    %c0_i32_33 = arith.constant 0 : i32
    %45 = arith.cmpi eq, %arg2, %c0_i32_33 : i32
    %46 = arith.extui %45 : i1 to i32
    %c0_i32_34 = arith.constant 0 : i32
    %47 = arith.cmpi ne, %46, %c0_i32_34 : i32
    scf.if %47 {
      %c0_35 = arith.constant 0 : index
      %c0_36 = arith.constant 0 : index
      %48 = vector.load %arg11[%c0_35, %c0_36] : memref<8x128xf32, #tpu.memory_space<vmem>>, vector<8x128xf32>
      %c0_37 = arith.constant 0 : index
      %c0_38 = arith.constant 0 : index
      %49 = vector.load %arg10[%c0_37, %c0_38] : memref<8x1xf32, #tpu.memory_space<vmem>>, vector<8x1xf32>
      %50 = vector.broadcast %49 : vector<8x1xf32> to vector<8x128xf32>
      %51 = arith.divf %48, %50 : vector<8x128xf32>
      %c0_39 = arith.constant 0 : index
      %c0_40 = arith.constant 0 : index
      %c0_41 = arith.constant 0 : index
      %52 = vector.load %arg8[%c0_39, %c0_40, %c0_41] : memref<1x8x128xf32, #tpu.memory_space<vmem>>, vector<1x8x128xf32>
      %53 = vector.shape_cast %52 : vector<1x8x128xf32> to vector<8x128xf32>
      %54 = vector.shape_cast %51 : vector<8x128xf32> to vector<1x8x128xf32>
      tpu.vector_store %arg8[%c0_39, %c0_40, %c0_41], %54 {strides = array<i32>} : memref<1x8x128xf32, #tpu.memory_space<vmem>>, vector<1x8x128xf32>,
    } else {
    }
    return
  }
  func.func @transform_0(%arg0: i32, %arg1: i32, %arg2: i32) -> (i32, i32, i32) {
    %c0_i32 = arith.constant 0 : i32
    %c0_i32_0 = arith.constant 0 : i32
    return %arg0, %arg1, %c0_i32 : i32, i32, i32
  }
  func.func @transform_1(%arg0: i32, %arg1: i32, %arg2: i32) -> (i32, i32, i32) {
    %c0_i32 = arith.constant 0 : i32
    %c0_i32_0 = arith.constant 0 : i32
    return %arg0, %c0_i32, %arg2 : i32, i32, i32
  }
  func.func @transform_2(%arg0: i32, %arg1: i32, %arg2: i32) -> (i32, i32, i32) {
    %c0_i32 = arith.constant 0 : i32
    %c0_i32_0 = arith.constant 0 : i32
    return %arg0, %c0_i32, %arg2 : i32, i32, i32
  }
  func.func @transform_3(%arg0: i32, %arg1: i32, %arg2: i32) -> (i32, i32) {
    %c0_i32 = arith.constant 0 : i32
    %c0_i32_0 = arith.constant 0 : i32
    %c0_i32_1 = arith.constant 0 : i32
    return %c0_i32, %c0_i32_0 : i32, i32
  }
  func.func @transform_4(%arg0: i32, %arg1: i32, %arg2: i32) -> (i32, i32) {
    %c0_i32 = arith.constant 0 : i32
    %c0_i32_0 = arith.constant 0 : i32
    %c0_i32_1 = arith.constant 0 : i32
    return %c0_i32, %c0_i32_0 : i32, i32
  }
  func.func @transform_5(%arg0: i32, %arg1: i32, %arg2: i32) -> (i32, i32, i32) {
    %c0_i32 = arith.constant 0 : i32
    %c0_i32_0 = arith.constant 0 : i32
    return %arg0, %arg1, %c0_i32 : i32, i32, i32
  }
}

</mosaic_0001>

<llo_original>
// kernel: tpu_custom_call.1
$region0: #{tpu_custom_call.1}
  #allocation0 [shape = 'u32[]', space=smem, size = 0x4, offset = 0x4, fixed_abs, tag = 'smem constant byte address 0x4 - core index']
  #allocation1 [shape = 'u32[144,128]{1,0:T(1,128)}', space=vmem, size = 0x12000, scoped, tag = 'internal scratch']
  #allocation2 [shape = 'f32[8,1]{1,0:T(8,128)}', space=vmem, size = 0x1000, scoped, tag = 'scratch operand']
  #allocation3 [shape = 'f32[8,1]{1,0:T(8,128)}', space=vmem, size = 0x1000, scoped, tag = 'scratch operand']
  #allocation4 [shape = 'f32[8,128]{1,0:T(8,128)}', space=vmem, size = 0x1000, scoped, tag = 'scratch operand']
  #allocation5 [shape = 'bf16[8,128]{1,0:T(8,128)(2,1)}', space=vmem, size = 0x800, scoped, tag = 'scratch operand']
  %s0 = inlined_call_operand.hbm [shape: bf16[2,8,32], index: 0, kind: input, shape index: {}]
  %s1 = inlined_call_operand.hbm [shape: bf16[2,8,32], index: 1, kind: input, shape index: {}]
  %s2 = inlined_call_operand.hbm [shape: bf16[2,8,32], index: 2, kind: input, shape index: {}]
  %s3 = inlined_call_operand.hbm [shape: bf16[32,384], index: 3, kind: input, shape index: {}]
  %s4 = inlined_call_operand.vmem [shape: f32[1,384], index: 4, kind: input, shape index: {}]
  %s5 = inlined_call_operand.hbm [shape: f32[2,8,128], index: 5, kind: output, shape index: {}]
  %s6 = sld [smem:[#allocation0]]
  $region77: #{tpu_custom_call.1} parent=0
    _
  %s8 = ssub.s32 1, %s6
  %s9 = scalar_select 0, %s8, %s6
  $region1: #{tpu_custom_call.1} parent=0
    #allocation6 [shape = 'u8[4096]{0}', space=vmem, size = 0x1000, scoped, tag = 'input window, operand 0']
    #allocation7 [shape = 's32[2]{0}', space=sflag, size = 0x8, scoped, tag = 'scoped memory for tpu_custom_call.1']
    #allocation8 [shape = 's32[2]{0}', space=sflag, size = 0x8, scoped, tag = 'scoped memory for tpu_custom_call.1']
    #allocation9 [shape = 'u8[4096]{0}', space=vmem, size = 0x1000, scoped, tag = 'input window, operand 1']
    #allocation10 [shape = 's32[2]{0}', space=sflag, size = 0x8, scoped, tag = 'scoped memory for tpu_custom_call.1']
    #allocation11 [shape = 'u8[4096]{0}', space=vmem, size = 0x1000, scoped, tag = 'input window, operand 2']
    #allocation12 [shape = 'u8[24576]{0}', space=vmem, size = 0x6000, scoped, tag = 'input window, operand 3, single buffered']
    #allocation13 [shape = 's32[1]{0}', space=sflag, size = 0x4, scoped, tag = 'scoped memory for tpu_custom_call.1']
    #allocation14 [shape = 'u8[8192]{0}', space=vmem, size = 0x2000, scoped, tag = 'output window, operand 0']
    %10 = vsyncpa [#allocation7], 0
    %s11 = scalar_lea.sflag [#allocation7], 1
    %12 = vsyncpa %s11, 0
    %13 = vsyncpa [#allocation10], 0
    %s14 = scalar_lea.sflag [#allocation10], 1
    %15 = vsyncpa %s14, 0
    %16 = vsyncpa [#allocation13], 0
    %17 = vsyncpa [#allocation8], 0
    %s18 = scalar_lea.sflag [#allocation8], 1
    %19 = vsyncpa %s18, 0
    loop: start=0, step=1, limit=4
    $region2: #{tpu_custom_call.1} parent=1 // loop_pre_header
      _
    $region3: #{tpu_custom_call.1} parent=1 // loop_header
      %s21 = sphi 0, %s25
      %p22 = scmp.ge.s32.totalorder %s21, 4
      %s28 = sphi 0, %s47
      %s29 = sphi 0, %s43
      %s30 = sphi 0, %s39
      %s31 = sphi 0, %s28
      %s32 = sphi 0, %s29
      %s33 = sphi 0, %s30
      %s34 = sphi 0, %s31
      %s35 = sphi 0, %s32
      %s36 = sphi 0, %s33
      %s52 = sphi 0, %s54
      %s55 = sphi 0, %s52
      %s56 = sphi 0, %s55
      %s72 = sphi 0, %s56
      %s80 = sphi 0, %s82
      %s83 = sphi 0, %s80
      %s84 = sphi 0, %s83
      %s100 = sphi 0, %s84
      %s108 = sphi 0, %s110
      %s111 = sphi 0, %s108
      %s112 = sphi 0, %s111
      %s128 = sphi 0, %s112
      %s132 = sphi 0, %s132
      %s134 = sphi 0, %s132
      %s135 = sphi 0, %s134
      %s149 = sphi 0, %s135
      %s153 = sphi 0, %s153
      %s155 = sphi 0, %s153
      %s156 = sphi 0, %s155
      %s170 = sphi 0, %s156
      %s178 = sphi 0, %s180
      %s181 = sphi 0, %s178
      %s182 = sphi 0, %s181
      %s198 = sphi 0, %s182
    $region4: #{tpu_custom_call.1} parent=1 // loop_header_branch
      %24 = sbr.rel (%p22) target = $region8
    $region5: #{tpu_custom_call.1} parent=1 // loop_body
      %s26 = ssub.s32 %s21, 1
      %s27 = ssub.s32 %s21, 2
      %s37 = sadd.s32 1, %s30
      %p38 = scmp.ge.s32.totalorder %s37, 1
      %s39 = scalar_select %p38, 0, %s37
      %s40 = sadd.s32 1, %s29
      %s41 = scalar_select %p38, %s40, %s29
      %p42 = scmp.ge.s32.totalorder %s41, 1
      %s43 = scalar_select %p42, 0, %s41
      %s44 = sadd.s32 1, %s28
      %s45 = scalar_select %p42, %s44, %s28
      %p46 = scmp.ge.s32.totalorder %s45, 2
      %s47 = scalar_select %p46, 0, %s45
      %s48 = ssub.s32 %s28, %s47
      %s49 = ssub.s32 %s29, %s43
      %s50 = sor.u32 %s48, %s49
      %p51 = scmp.eq.s32.totalorder %s50, 0
      %s53 = sadd.s32 %s52, 1
      %s54 = scalar_select %p51, %s52, %s53
      %p57 = pneg %p51
      %p58 = scmp.eq.s32.totalorder %s21, 1
      %p59 = por %p57, %p58
      %p60 = scmp.ne.s32.totalorder %s52, %s55
      %p61 = scmp.eq.s32.totalorder %s21, 0
      %p62 = por %p60, %p61
      %p63 = scmp.ne.s32.totalorder %s52, %s55
      %p64 = scmp.eq.s32.totalorder %s26, 1
      %p65 = por %p63, %p64
      %p66 = scmp.ne.s32.totalorder %s55, %s56
      %p67 = scmp.eq.s32.totalorder %s26, 0
      %p68 = por %p66, %p67
      %p69 = scmp.ne.s32.totalorder %s55, %s56
      %p70 = scmp.eq.s32.totalorder %s27, 1
      %p71 = por %p69, %p70
      %p73 = scmp.ne.s32.totalorder %s56, %s72
      %p74 = scmp.eq.s32.totalorder %s27, 0
      %p75 = por %p73, %p74
      %s76 = ssub.s32 %s28, %s47
      %s77 = ssub.s32 %s30, %s39
      %s78 = sor.u32 %s76, %s77
      %p79 = scmp.eq.s32.totalorder %s78, 0
      %s81 = sadd.s32 %s80, 1
      %s82 = scalar_select %p79, %s80, %s81
      %p85 = pneg %p79
      %p86 = scmp.eq.s32.totalorder %s21, 1
      %p87 = por %p85, %p86
      %p88 = scmp.ne.s32.totalorder %s80, %s83
      %p89 = scmp.eq.s32.totalorder %s21, 0
      %p90 = por %p88, %p89
      %p91 = scmp.ne.s32.totalorder %s80, %s83
      %p92 = scmp.eq.s32.totalorder %s26, 1
      %p93 = por %p91, %p92
      %p94 = scmp.ne.s32.totalorder %s83, %s84
      %p95 = scmp.eq.s32.totalorder %s26, 0
      %p96 = por %p94, %p95
      %p97 = scmp.ne.s32.totalorder %s83, %s84
      %p98 = scmp.eq.s32.totalorder %s27, 1
      %p99 = por %p97, %p98
      %p101 = scmp.ne.s32.totalorder %s84, %s100
      %p102 = scmp.eq.s32.totalorder %s27, 0
      %p103 = por %p101, %p102
      %s104 = ssub.s32 %s28, %s47
      %s105 = ssub.s32 %s30, %s39
      %s106 = sor.u32 %s104, %s105
      %p107 = scmp.eq.s32.totalorder %s106, 0
      %s109 = sadd.s32 %s108, 1
      %s110 = scalar_select %p107, %s108, %s109
      %p113 = pneg %p107
      %p114 = scmp.eq.s32.totalorder %s21, 1
      %p115 = por %p113, %p114
      %p116 = scmp.ne.s32.totalorder %s108, %s111
      %p117 = scmp.eq.s32.totalorder %s21, 0
      %p118 = por %p116, %p117
      %p119 = scmp.ne.s32.totalorder %s108, %s111
      %p120 = scmp.eq.s32.totalorder %s26, 1
      %p121 = por %p119, %p120
      %p122 = scmp.ne.s32.totalorder %s111, %s112
      %p123 = scmp.eq.s32.totalorder %s26, 0
      %p124 = por %p122, %p123
      %p125 = scmp.ne.s32.totalorder %s111, %s112
      %p126 = scmp.eq.s32.totalorder %s27, 1
      %p127 = por %p125, %p126
      %p129 = scmp.ne.s32.totalorder %s112, %s128
      %p130 = scmp.eq.s32.totalorder %s27, 0
      %p131 = por %p129, %p130
      %s133 = sadd.s32 %s132, 1
      %p136 = scmp.eq.s32.totalorder %s21, 1
      %p137 = scmp.ne.s32.totalorder %s132, %s134
      %p138 = scmp.eq.s32.totalorder %s21, 0
      %p139 = por %p137, %p138
      %p140 = scmp.ne.s32.totalorder %s132, %s134
      %p141 = scmp.eq.s32.totalorder %s26, 1
      %p142 = por %p140, %p141
      %p143 = scmp.ne.s32.totalorder %s134, %s135
      %p144 = scmp.eq.s32.totalorder %s26, 0
      %p145 = por %p143, %p144
      %p146 = scmp.ne.s32.totalorder %s134, %s135
      %p147 = scmp.eq.s32.totalorder %s27, 1
      %p148 = por %p146, %p147
      %p150 = scmp.ne.s32.totalorder %s135, %s149
      %p151 = scmp.eq.s32.totalorder %s27, 0
      %p152 = por %p150, %p151
      %s154 = sadd.s32 %s153, 1
      %p157 = scmp.eq.s32.totalorder %s21, 1
      %p158 = scmp.ne.s32.totalorder %s153, %s155
      %p159 = scmp.eq.s32.totalorder %s21, 0
      %p160 = por %p158, %p159
      %p161 = scmp.ne.s32.totalorder %s153, %s155
      %p162 = scmp.eq.s32.totalorder %s26, 1
      %p163 = por %p161, %p162
      %p164 = scmp.ne.s32.totalorder %s155, %s156
      %p165 = scmp.eq.s32.totalorder %s26, 0
      %p166 = por %p164, %p165
      %p167 = scmp.ne.s32.totalorder %s155, %s156
      %p168 = scmp.eq.s32.totalorder %s27, 1
      %p169 = por %p167, %p168
      %p171 = scmp.ne.s32.totalorder %s156, %s170
      %p172 = scmp.eq.s32.totalorder %s27, 0
      %p173 = por %p171, %p172
      %s174 = ssub.s32 %s28, %s47
      %s175 = ssub.s32 %s29, %s43
      %s176 = sor.u32 %s174, %s175
      %p177 = scmp.eq.s32.totalorder %s176, 0
      %s179 = sadd.s32 %s178, 1
      %s180 = scalar_select %p177, %s178, %s179
      %p183 = pneg %p177
      %p184 = scmp.eq.s32.totalorder %s21, 1
      %p185 = por %p183, %p184
      %p186 = scmp.ne.s32.totalorder %s178, %s181
      %p187 = scmp.eq.s32.totalorder %s21, 0
      %p188 = por %p186, %p187
      %p189 = scmp.ne.s32.totalorder %s178, %s181
      %p190 = scmp.eq.s32.totalorder %s26, 1
      %p191 = por %p189, %p190
      %p192 = scmp.ne.s32.totalorder %s181, %s182
      %p193 = scmp.eq.s32.totalorder %s26, 0
      %p194 = por %p192, %p193
      %p195 = scmp.ne.s32.totalorder %s181, %s182
      %p196 = scmp.eq.s32.totalorder %s27, 1
      %p197 = por %p195, %p196
      %p199 = scmp.ne.s32.totalorder %s182, %s198
      %p200 = scmp.eq.s32.totalorder %s27, 0
      %p201 = por %p199, %p200
      %p202 = scmp.le.s32.totalorder 1, %s21
      %p203 = scmp.lt.s32.totalorder %s21, 3
      %p204 = pnand %p202, %p203
      %p205 = pneg %p204
      // Predicated region
      $region9: #{tpu_custom_call.1} parent=5 // pred_check
        _
      $region10: #{tpu_custom_call.1} parent=5 // pred_check_branch
        %207 = sbr.rel (%p204) target = $region12
      $region11: #{tpu_custom_call.1} parent=5 // pred_region
        %s208 = ssub.s32 %s21, 1
        // Predicated region
        $region13: #{tpu_custom_call.1} parent=11 // pred_check
          %p209 = pneg %p145
        $region14: #{tpu_custom_call.1} parent=11 // pred_check_branch
          %211 = sbr.rel (%p209) target = $region16
        $region15: #{tpu_custom_call.1} parent=11 // pred_region
          %s213 = ssub.s32 768, 768
          %214 = vsyncadd [#allocation13], %s213
          %s215 = sshll.u32 [#allocation12], 4
          %s216 = int_to_ptr.vmem [resolvable:$true] %s215
          %221 = dma.hbm_to_vmem [thread:$0]  %s3, 768, %s216, [#allocation13], 192, 192, 12
        $region16: #{tpu_custom_call.1} parent=11 // pred_fallthru
          _
        // Predicated region
        $region17: #{tpu_custom_call.1} parent=11 // pred_check
          %p222 = pneg %p166
        $region18: #{tpu_custom_call.1} parent=11 // pred_check_branch
          %224 = sbr.rel (%p222) target = $region20
        $region19: #{tpu_custom_call.1} parent=11 // pred_region
          _
        $region20: #{tpu_custom_call.1} parent=11 // pred_fallthru
          _
      $region12: #{tpu_custom_call.1} parent=5 // pred_fallthru
        _
      %p225 = scmp.lt.s32.totalorder %s21, 2
      // Predicated region
      $region21: #{tpu_custom_call.1} parent=5 // pred_check
        %p226 = pneg %p225
      $region22: #{tpu_custom_call.1} parent=5 // pred_check_branch
        %228 = sbr.rel (%p226) target = $region24
      $region23: #{tpu_custom_call.1} parent=5 // pred_region
        // Predicated region
        $region25: #{tpu_custom_call.1} parent=23 // pred_check
          %p229 = pneg %p62
        $region26: #{tpu_custom_call.1} parent=23 // pred_check_branch
          %231 = sbr.rel (%p229) target = $region28
        $region27: #{tpu_custom_call.1} parent=23 // pred_region
          %s232 = sand.u32 %s52, 1
          %s233 = scalar_lea.sflag [#allocation7], %s232
          %s234 = sand.u32 %s52, 1
          %s235 = smul.addr %s234, 4
          %s236 = scalar_lea.vmem [#allocation6], %s235
          %s238 = ssub.s32 64, 64
          %239 = vsyncadd %s233, %s238
          %s240 = sadd.s32 %s29, %s28
          %s241 = smul.addr %s240, 64
          %s242 = scalar_lea.hbm %s0, %s241
          %s244 = sshll.u32 %s236, 4
          %s245 = int_to_ptr.vmem [resolvable:$true] %s244
          %247 = dma.hbm_to_vmem [thread:$0]  %s242, 64, %s245, %s233
        $region28: #{tpu_custom_call.1} parent=23 // pred_fallthru
          _
        // Predicated region
        $region29: #{tpu_custom_call.1} parent=23 // pred_check
          %p248 = pneg %p90
        $region30: #{tpu_custom_call.1} parent=23 // pred_check_branch
          %250 = sbr.rel (%p248) target = $region32
        $region31: #{tpu_custom_call.1} parent=23 // pred_region
          %s251 = sand.u32 %s21, 1
          %s252 = scalar_lea.sflag [#allocation10], %s251
          %s253 = sand.u32 %s80, 1
          %s254 = smul.addr %s253, 4
          %s255 = scalar_lea.vmem [#allocation9], %s254
          %s257 = ssub.s32 64, 64
          %258 = vsyncadd %s252, %s257
          %s259 = sadd.s32 %s30, %s28
          %s260 = smul.addr %s259, 64
          %s261 = scalar_lea.hbm %s1, %s260
          %s263 = sshll.u32 %s255, 4
          %s264 = int_to_ptr.vmem [resolvable:$true] %s263
          %266 = dma.hbm_to_vmem [thread:$0]  %s261, 64, %s264, %s252
        $region32: #{tpu_custom_call.1} parent=23 // pred_fallthru
          _
        // Predicated region
        $region33: #{tpu_custom_call.1} parent=23 // pred_check
          %p267 = pneg %p118
        $region34: #{tpu_custom_call.1} parent=23 // pred_check_branch
          %269 = sbr.rel (%p267) target = $region36
        $region35: #{tpu_custom_call.1} parent=23 // pred_region
          %s270 = sand.u32 %s21, 1
          %s271 = scalar_lea.sflag [#allocation10], %s270
          %s272 = sand.u32 %s108, 1
          %s273 = smul.addr %s272, 4
          %s274 = scalar_lea.vmem [#allocation11], %s273
          %s276 = ssub.s32 64, 64
          %277 = vsyncadd %s271, %s276
          %s278 = sadd.s32 %s30, %s28
          %s279 = smul.addr %s278, 64
          %s280 = scalar_lea.hbm %s2, %s279
          %s282 = sshll.u32 %s274, 4
          %s283 = int_to_ptr.vmem [resolvable:$true] %s282
          %285 = dma.hbm_to_vmem [thread:$0]  %s280, 64, %s283, %s271
        $region36: #{tpu_custom_call.1} parent=23 // pred_fallthru
          _
      $region24: #{tpu_custom_call.1} parent=5 // pred_fallthru
        _
      %p286 = scmp.le.s32.totalorder 1, %s21
      %p287 = scmp.lt.s32.totalorder %s21, 3
      %p288 = pnand %p286, %p287
      %p289 = pneg %p288
      // Predicated region
      $region37: #{tpu_custom_call.1} parent=5 // pred_check
        _
      $region38: #{tpu_custom_call.1} parent=5 // pred_check_branch
        %291 = sbr.rel (%p288) target = $region40
      $region39: #{tpu_custom_call.1} parent=5 // pred_region
        %s292 = ssub.s32 %s21, 1
        %s293 = sand.u32 %s55, 1
        %s294 = scalar_lea.sflag [#allocation7], %s293
        %s295 = sand.u32 %s55, 1
        %s296 = smul.addr %s295, 4
        %s297 = scalar_lea.vmem [#allocation6], %s296
        // Predicated region
        $region41: #{tpu_custom_call.1} parent=39 // pred_check
          %p298 = pneg %p68
        $region42: #{tpu_custom_call.1} parent=39 // pred_check_branch
          %300 = sbr.rel (%p298) target = $region44
        $region43: #{tpu_custom_call.1} parent=39 // pred_region
          %301 = dma.done %s294, 64
        $region44: #{tpu_custom_call.1} parent=39 // pred_fallthru
          _
        %s302 = sand.u32 %s26, 1
        %s303 = scalar_lea.sflag [#allocation10], %s302
        %s304 = sand.u32 %s83, 1
        %s305 = smul.addr %s304, 4
        %s306 = scalar_lea.vmem [#allocation9], %s305
        // Predicated region
        $region45: #{tpu_custom_call.1} parent=39 // pred_check
          %p307 = pneg %p96
        $region46: #{tpu_custom_call.1} parent=39 // pred_check_branch
          %309 = sbr.rel (%p307) target = $region48
        $region47: #{tpu_custom_call.1} parent=39 // pred_region
          %310 = dma.done %s303, 64
        $region48: #{tpu_custom_call.1} parent=39 // pred_fallthru
          _
        %s311 = sand.u32 %s26, 1
        %s312 = scalar_lea.sflag [#allocation10], %s311
        %s313 = sand.u32 %s111, 1
        %s314 = smul.addr %s313, 4
        %s315 = scalar_lea.vmem [#allocation11], %s314
        // Predicated region
        $region49: #{tpu_custom_call.1} parent=39 // pred_check
          %p316 = pneg %p124
        $region50: #{tpu_custom_call.1} parent=39 // pred_check_branch
          %318 = sbr.rel (%p316) target = $region52
        $region51: #{tpu_custom_call.1} parent=39 // pred_region
          %319 = dma.done %s312, 64
        $region52: #{tpu_custom_call.1} parent=39 // pred_fallthru
          _
        // Predicated region
        $region53: #{tpu_custom_call.1} parent=39 // pred_check
          %p320 = pneg %p145
        $region54: #{tpu_custom_call.1} parent=39 // pred_check_branch
          %322 = sbr.rel (%p320) target = $region56
        $region55: #{tpu_custom_call.1} parent=39 // pred_region
          %323 = dma.done [#allocation13], 768
        $region56: #{tpu_custom_call.1} parent=39 // pred_fallthru
          _
        %s324 = sand.u32 %s55, 1
        %s325 = scalar_lea.sflag [#allocation7], %s324
        %s326 = sand.u32 %s55, 1
        %s327 = smul.addr %s326, 4
        %s328 = scalar_lea.vmem [#allocation6], %s327
        %p329 = pneg %p68
        %p330 = pneg %p65
        %s331 = sand.u32 %s26, 1
        %s332 = scalar_lea.sflag [#allocation10], %s331
        %s333 = sand.u32 %s83, 1
        %s334 = smul.addr %s333, 4
        %s335 = scalar_lea.vmem [#allocation9], %s334
        %p336 = pneg %p96
        %p337 = pneg %p93
        %s338 = sand.u32 %s26, 1
        %s339 = scalar_lea.sflag [#allocation10], %s338
        %s340 = sand.u32 %s111, 1
        %s341 = smul.addr %s340, 4
        %s342 = scalar_lea.vmem [#allocation11], %s341
        %p343 = pneg %p124
        %p344 = pneg %p121
        %p345 = pneg %p145
        %p346 = pneg %p142
        %p347 = pneg %p166
        %p348 = pneg %p163
        %p349 = pneg %p194
        %p350 = pneg %p191
        %s351 = sand.u32 %s181, 1
        %s352 = scalar_lea.sflag [#allocation8], %s351
        %s353 = sand.u32 %s181, 1
        %s354 = smul.addr %s353, 8
        %s355 = scalar_lea.vmem [#allocation14], %s354
        %p357 = scmp.eq.s32.totalorder %s33, 0
        // Predicated region
        $region57: #{tpu_custom_call.1} parent=39 // pred_check
          %p358 = pneg %p357
        $region58: #{tpu_custom_call.1} parent=39 // pred_check_branch
          %360 = sbr.rel (%p358) target = $region60
        $region59: #{tpu_custom_call.1} parent=39 // pred_region
          %v361 = vld [vmem:[%s297] sm:$0xf]
          %v362 = vld [vmem:[#allocation12] sm:$0xf]
          %v363 = vld [vmem:[#allocation12 + $0xc] sm:$0xf]
          %v364 = vld [vmem:[#allocation12 + $0x18] sm:$0xf]
          %v365 = vld [vmem:[#allocation12 + $0x24] sm:$0xf]
          %v366 = vld [vmem:[%s4] sm:$0x1]
          %v368 = vlaneseq
          %v369 = vshrl.u32 %v368, 7
          %v370 = vsub.s32 0, %v369
          %v371 = vrot.slane %v366, %v370
          %v377 = vunpack.c.l.b16 %v362
          %v378 = vunpack.c.l.b16 %v363
          %v379 = vunpack.c.l.b16 %v364
          %v380 = vunpack.c.l.b16 %v365
          %v381 = vpack.c.b16 %v378, %v377
          %v382 = vpack.c.b16 %v380, %v379
          %vm385 = vcmask 261120
          %v387 = vsel %vm385, %v361, 0
          %389 = vmatprep.subr.bf16.mxu0 0
          %390 = vmatpush1.bf16.msra.mxu0 %v381
          %391 = vmatprep.subr.bf16.mxu0 0
          %392 = vmatpush1.bf16.msra.mxu0 %v382
          %393 = vmatprep.subr.bf16.mxu0 0
          %394 = vmatpush1.bf16.msra.mxu0 0
          %395 = vmatprep.subr.bf16.mxu0 0
          %396 = vmatpush1.bf16.msra.mxu0 0
          %397 = vmatprep.subr.bf16.mxu0 0
          %398 = vmatpush1.bf16.msra.mxu0 0
          %399 = vmatprep.subr.bf16.mxu0 0
          %400 = vmatpush1.bf16.msra.mxu0 0
          %401 = vmatprep.subr.bf16.mxu0 0
          %402 = vmatpush1.bf16.msra.mxu0 0
          %403 = vmatprep.subr.bf16.mxu0 0
          %404 = vmatpush1.bf16.msra.mxu0 0
          %405 = vmatprep.subr.bf16.mxu0 0
          %406 = vmatpush1.bf16.msra.mxu0 0
          %407 = vmatprep.subr.bf16.mxu0 0
          %408 = vmatpush1.bf16.msra.mxu0 0
          %409 = vmatprep.subr.bf16.mxu0 0
          %410 = vmatpush1.bf16.msra.mxu0 0
          %411 = vmatprep.subr.bf16.mxu0 0
          %412 = vmatpush1.bf16.msra.mxu0 0
          %413 = vmatprep.subr.bf16.mxu0 0
          %414 = vmatpush1.bf16.msra.mxu0 0
          %415 = vmatprep.subr.bf16.mxu0 0
          %416 = vmatpush1.bf16.msra.mxu0 0
          %417 = vmatprep.subr.bf16.mxu0 0
          %418 = vmatpush1.bf16.msra.mxu0 0
          %419 = vmatprep.subr.bf16.mxu0 0
          %420 = vmatpush1.bf16.msra.mxu0 0
          %421 = vmatprep.mubr.bf16.mxu0 0
          %422 = vmatmul.mubr.bf16.gmra.mrb[0].mxu0 %v387
          %v423 = vpop.f32.mrb[0].mxu0
          %v424 = vadd.f32 %v371, %v423
          %v425 = vpop.f32.mrb[0].mxu0
          %v426 = vpop.f32.mrb[0].mxu0
          %v427 = vpop.f32.mrb[0].mxu0
          %428 = vdwg.mxu0
          %v429 = vpack.c.bf16 %v424, %v424
          %430 = vst [vmem:[#allocation5] sm:$0xf] %v429
          %vm431 = vcmask 7168
          %432 = vst.msk [vmem:[#allocation2] sm:$0xff] %vm431, -inf
          %433 = vst.msk [vmem:[#allocation3] sm:$0xff] %vm431, 0.0
          %434 = vst [vmem:[#allocation4] sm:$0xff] 0.0
        $region60: #{tpu_custom_call.1} parent=39 // pred_fallthru
          _
        %v435 = vld [vmem:[%s306] sm:$0xf]
        %v436 = vld [vmem:[#allocation12 + $0x4] sm:$0xf]
        %v437 = vld [vmem:[#allocation12 + $0x10] sm:$0xf]
        %v438 = vld [vmem:[#allocation12 + $0x1c] sm:$0xf]
        %v439 = vld [vmem:[#allocation12 + $0x28] sm:$0xf]
        %v440 = vld [vmem:[%s4 + $0x1] sm:$0x1]
        %v442 = vlaneseq
        %v443 = vshrl.u32 %v442, 7
        %v444 = vsub.s32 0, %v443
        %v445 = vrot.slane %v440, %v444
        %v451 = vunpack.c.l.b16 %v436
        %v452 = vunpack.c.l.b16 %v437
        %v453 = vunpack.c.l.b16 %v438
        %v454 = vunpack.c.l.b16 %v439
        %v455 = vpack.c.b16 %v452, %v451
        %v456 = vpack.c.b16 %v454, %v453
        %vm459 = vcmask 261120
        %v461 = vsel %vm459, %v435, 0
        %463 = vmatprep.subr.bf16.mxu0 0
        %464 = vmatpush1.bf16.msra.mxu0 %v455
        %465 = vmatprep.subr.bf16.mxu0 0
        %466 = vmatpush1.bf16.msra.mxu0 %v456
        %467 = vmatprep.subr.bf16.mxu0 0
        %468 = vmatpush1.bf16.msra.mxu0 0
        %469 = vmatprep.subr.bf16.mxu0 0
        %470 = vmatpush1.bf16.msra.mxu0 0
        %471 = vmatprep.subr.bf16.mxu0 0
        %472 = vmatpush1.bf16.msra.mxu0 0
        %473 = vmatprep.subr.bf16.mxu0 0
        %474 = vmatpush1.bf16.msra.mxu0 0
        %475 = vmatprep.subr.bf16.mxu0 0
        %476 = vmatpush1.bf16.msra.mxu0 0
        %477 = vmatprep.subr.bf16.mxu0 0
        %478 = vmatpush1.bf16.msra.mxu0 0
        %479 = vmatprep.subr.bf16.mxu0 0
        %480 = vmatpush1.bf16.msra.mxu0 0
        %481 = vmatprep.subr.bf16.mxu0 0
        %482 = vmatpush1.bf16.msra.mxu0 0
        %483 = vmatprep.subr.bf16.mxu0 0
        %484 = vmatpush1.bf16.msra.mxu0 0
        %485 = vmatprep.subr.bf16.mxu0 0
        %486 = vmatpush1.bf16.msra.mxu0 0
        %487 = vmatprep.subr.bf16.mxu0 0
        %488 = vmatpush1.bf16.msra.mxu0 0
        %489 = vmatprep.subr.bf16.mxu0 0
        %490 = vmatpush1.bf16.msra.mxu0 0
        %491 = vmatprep.subr.bf16.mxu0 0
        %492 = vmatpush1.bf16.msra.mxu0 0
        %493 = vmatprep.subr.bf16.mxu0 0
        %494 = vmatpush1.bf16.msra.mxu0 0
        %495 = vmatprep.mubr.bf16.mxu0 0
        %496 = vmatmul.mubr.bf16.gmra.mrb[0].mxu0 %v461
        %v497 = vpop.f32.mrb[0].mxu0
        %v498 = vadd.f32 %v445, %v497
        %v499 = vpop.f32.mrb[0].mxu0
        %v500 = vpop.f32.mrb[0].mxu0
        %v501 = vpop.f32.mrb[0].mxu0
        %502 = vdwg.mxu0
        %v503 = vld [vmem:[%s315] sm:$0xf]
        %v504 = vld [vmem:[#allocation12 + $0x8] sm:$0xf]
        %v505 = vld [vmem:[#allocation12 + $0x14] sm:$0xf]
        %v506 = vld [vmem:[#allocation12 + $0x20] sm:$0xf]
        %v507 = vld [vmem:[#allocation12 + $0x2c] sm:$0xf]
        %v508 = vld [vmem:[%s4 + $0x2] sm:$0x1]
        %v510 = vlaneseq
        %v511 = vshrl.u32 %v510, 7
        %v512 = vsub.s32 0, %v511
        %v513 = vrot.slane %v508, %v512
        %v519 = vunpack.c.l.b16 %v504
        %v520 = vunpack.c.l.b16 %v505
        %v521 = vunpack.c.l.b16 %v506
        %v522 = vunpack.c.l.b16 %v507
        %v523 = vpack.c.b16 %v520, %v519
        %v524 = vpack.c.b16 %v522, %v521
        %v528 = vsel %vm459, %v503, 0
        %530 = vmatprep.subr.bf16.mxu0 0
        %531 = vmatpush1.bf16.msra.mxu0 %v523
        %532 = vmatprep.subr.bf16.mxu0 0
        %533 = vmatpush1.bf16.msra.mxu0 %v524
        %534 = vmatprep.subr.bf16.mxu0 0
        %535 = vmatpush1.bf16.msra.mxu0 0
        %536 = vmatprep.subr.bf16.mxu0 0
        %537 = vmatpush1.bf16.msra.mxu0 0
        %538 = vmatprep.subr.bf16.mxu0 0
        %539 = vmatpush1.bf16.msra.mxu0 0
        %540 = vmatprep.subr.bf16.mxu0 0
        %541 = vmatpush1.bf16.msra.mxu0 0
        %542 = vmatprep.subr.bf16.mxu0 0
        %543 = vmatpush1.bf16.msra.mxu0 0
        %544 = vmatprep.subr.bf16.mxu0 0
        %545 = vmatpush1.bf16.msra.mxu0 0
        %546 = vmatprep.subr.bf16.mxu0 0
        %547 = vmatpush1.bf16.msra.mxu0 0
        %548 = vmatprep.subr.bf16.mxu0 0
        %549 = vmatpush1.bf16.msra.mxu0 0
        %550 = vmatprep.subr.bf16.mxu0 0
        %551 = vmatpush1.bf16.msra.mxu0 0
        %552 = vmatprep.subr.bf16.mxu0 0
        %553 = vmatpush1.bf16.msra.mxu0 0
        %554 = vmatprep.subr.bf16.mxu0 0
        %555 = vmatpush1.bf16.msra.mxu0 0
        %556 = vmatprep.subr.bf16.mxu0 0
        %557 = vmatpush1.bf16.msra.mxu0 0
        %558 = vmatprep.subr.bf16.mxu0 0
        %559 = vmatpush1.bf16.msra.mxu0 0
        %560 = vmatprep.subr.bf16.mxu0 0
        %561 = vmatpush1.bf16.msra.mxu0 0
        %562 = vmatprep.mubr.bf16.mxu0 0
        %563 = vmatmul.mubr.bf16.gmra.mrb[0].mxu0 %v528
        %v564 = vpop.f32.mrb[0].mxu0
        %v565 = vadd.f32 %v513, %v564
        %v566 = vpop.f32.mrb[0].mxu0
        %v567 = vpop.f32.mrb[0].mxu0
        %v568 = vpop.f32.mrb[0].mxu0
        %569 = vdwg.mxu0
        %v570 = vld [vmem:[#allocation5] sm:$0xf]
        %v571 = vpack.c.bf16 %v498, %v498
        %572 = vmatprep.subr.bf16.mxu0 0
        %573 = vmatpush1.bf16.xpose.msra.mxu0 %v571
        %574 = vmatprep.subr.bf16.mxu0 0
        %575 = vmatpush1.bf16.xpose.msra.mxu0 0
        %576 = vmatprep.subr.bf16.mxu0 0
        %577 = vmatpush1.bf16.xpose.msra.mxu0 0
        %578 = vmatprep.subr.bf16.mxu0 0
        %579 = vmatpush1.bf16.xpose.msra.mxu0 0
        %580 = vmatprep.subr.bf16.mxu0 0
        %581 = vmatpush1.bf16.xpose.msra.mxu0 0
        %582 = vmatprep.subr.bf16.mxu0 0
        %583 = vmatpush1.bf16.xpose.msra.mxu0 0
        %584 = vmatprep.subr.bf16.mxu0 0
        %585 = vmatpush1.bf16.xpose.msra.mxu0 0
        %586 = vmatprep.subr.bf16.mxu0 0
        %587 = vmatpush1.bf16.xpose.msra.mxu0 0
        %588 = vmatprep.subr.bf16.mxu0 0
        %589 = vmatpush1.bf16.xpose.msra.mxu0 0
        %590 = vmatprep.subr.bf16.mxu0 0
        %591 = vmatpush1.bf16.xpose.msra.mxu0 0
        %592 = vmatprep.subr.bf16.mxu0 0
        %593 = vmatpush1.bf16.xpose.msra.mxu0 0
        %594 = vmatprep.subr.bf16.mxu0 0
        %595 = vmatpush1.bf16.xpose.msra.mxu0 0
        %596 = vmatprep.subr.bf16.mxu0 0
        %597 = vmatpush1.bf16.xpose.msra.mxu0 0
        %598 = vmatprep.subr.bf16.mxu0 0
        %599 = vmatpush1.bf16.xpose.msra.mxu0 0
        %600 = vmatprep.subr.bf16.mxu0 0
        %601 = vmatpush1.bf16.xpose.msra.mxu0 0
        %602 = vmatprep.subr.bf16.mxu0 0
        %603 = vmatpush1.bf16.xpose.msra.mxu0 0
        %604 = vmatprep.mubr.bf16.mxu0 0
        %605 = vmatmul.mubr.bf16.gmra.mrb[0].mxu0 %v570
        %v606 = vpop.f32.mrb[0].mxu0
        %v607 = vadd.f32 0.0, %v606
        %v608 = vpop.f32.mrb[0].mxu0
        %v609 = vpop.f32.mrb[0].mxu0
        %v610 = vpop.f32.mrb[0].mxu0
        %611 = vdwg.mxu0
        %v612 = vld [vmem:[#allocation2] sm:$0xff]
        %vm613 = vcmask 64512
        %v614 = vsel %vm613, %v607, -inf
        %615 = vmax.xlane.f32.xlu0 %v614
        %v616 = vpop.xlane.xlu0 %615
        %v617 = vmax.f32 %v612, %v616
        %v618 = vsub.f32 %v612, %v617
        %v619 = vmul.f32 %v618, 1.442695
        %v620 = vpow.pop %v619
        %622 = vset.pattern.permute.xlu0 0
        %623 = vperm.xlu0 %622, %v617
        %v624 = vpop.permute.xlu0 %623
        %v626 = vsub.f32 %v607, %v624
        %v627 = vmul.f32 %v626, 1.442695
        %v628 = vpow.pop %v627
        %v629 = vld [vmem:[#allocation3] sm:$0xff]
        %v630 = vmul.f32 %v620, %v629
        %v631 = vsel %vm613, %v628, 0.0
        %632 = vadd.xlane.f32.xlu0 %v631
        %v633 = vpop.xlane.xlu0 %632
        %v634 = vadd.f32 %v630, %v633
        %vm635 = vcmask 7168
        %636 = vst.msk [vmem:[#allocation3] sm:$0xff] %vm635, %v634
        %v637 = vld [vmem:[#allocation4] sm:$0xff]
        %639 = vset.pattern.permute.xlu0 0
        %640 = vperm.xlu0 %639, %v620
        %v641 = vpop.permute.xlu0 %640
        %v643 = vmul.f32 %v641, %v637
        %v644 = vpack.c.bf16 %v628, %v628
        %v645 = vpack.c.bf16 %v565, %v565
        %v647 = vsel %vm613, %v644, 0
        %vm649 = vcmask 1043456
        %v651 = vsel %vm649, %v645, 0
        %653 = vmatprep.subr.bf16.mxu0 0
        %654 = vmatpush1.bf16.msra.mxu0 %v651
        %655 = vmatprep.subr.bf16.mxu0 0
        %656 = vmatpush1.bf16.msra.mxu0 0
        %657 = vmatprep.subr.bf16.mxu0 0
        %658 = vmatpush1.bf16.msra.mxu0 0
        %659 = vmatprep.subr.bf16.mxu0 0
        %660 = vmatpush1.bf16.msra.mxu0 0
        %661 = vmatprep.subr.bf16.mxu0 0
        %662 = vmatpush1.bf16.msra.mxu0 0
        %663 = vmatprep.subr.bf16.mxu0 0
        %664 = vmatpush1.bf16.msra.mxu0 0
        %665 = vmatprep.subr.bf16.mxu0 0
        %666 = vmatpush1.bf16.msra.mxu0 0
        %667 = vmatprep.subr.bf16.mxu0 0
        %668 = vmatpush1.bf16.msra.mxu0 0
        %669 = vmatprep.subr.bf16.mxu0 0
        %670 = vmatpush1.bf16.msra.mxu0 0
        %671 = vmatprep.subr.bf16.mxu0 0
        %672 = vmatpush1.bf16.msra.mxu0 0
        %673 = vmatprep.subr.bf16.mxu0 0
        %674 = vmatpush1.bf16.msra.mxu0 0
        %675 = vmatprep.subr.bf16.mxu0 0
        %676 = vmatpush1.bf16.msra.mxu0 0
        %677 = vmatprep.subr.bf16.mxu0 0
        %678 = vmatpush1.bf16.msra.mxu0 0
        %679 = vmatprep.subr.bf16.mxu0 0
        %680 = vmatpush1.bf16.msra.mxu0 0
        %681 = vmatprep.subr.bf16.mxu0 0
        %682 = vmatpush1.bf16.msra.mxu0 0
        %683 = vmatprep.subr.bf16.mxu0 0
        %684 = vmatpush1.bf16.msra.mxu0 0
        %685 = vmatprep.mubr.bf16.mxu0 0
        %686 = vmatmul.mubr.bf16.gmra.mrb[0].mxu0 %v647
        %v687 = vpop.f32.mrb[0].mxu0
        %v688 = vadd.f32 0.0, %v687
        %v689 = vpop.f32.mrb[0].mxu0
        %v690 = vpop.f32.mrb[0].mxu0
        %v691 = vpop.f32.mrb[0].mxu0
        %692 = vdwg.mxu0
        %v693 = vadd.f32 %v643, %v688
        %694 = vst [vmem:[#allocation4] sm:$0xff] %v693
        %695 = vst.msk [vmem:[#allocation2] sm:$0xff] %vm635, %v617
        // Predicated region
        $region61: #{tpu_custom_call.1} parent=39 // pred_check
          %p696 = pneg %p357
        $region62: #{tpu_custom_call.1} parent=39 // pred_check_branch
          %698 = sbr.rel (%p696) target = $region64
        $region63: #{tpu_custom_call.1} parent=39 // pred_region
          %v699 = vld [vmem:[#allocation4] sm:$0xff]
          %v700 = vld [vmem:[#allocation3] sm:$0xff]
          %702 = vset.pattern.permute.xlu0 0
          %703 = vperm.xlu0 %702, %v700
          %v704 = vpop.permute.xlu0 %703
          %v706 = vrcp.pop %v704
          %v707 = vmul.f32 %v699, %v706
          %708 = vst [vmem:[%s355] sm:$0xff] %v707
        $region64: #{tpu_custom_call.1} parent=39 // pred_fallthru
          _
        %s709 = sand.u32 %s181, 1
        %s710 = scalar_lea.sflag [#allocation8], %s709
        %s711 = sand.u32 %s181, 1
        %s712 = smul.addr %s711, 8
        %s713 = scalar_lea.vmem [#allocation14], %s712
        // Predicated region
        $region65: #{tpu_custom_call.1} parent=39 // pred_check
          %p714 = pneg %p191
        $region66: #{tpu_custom_call.1} parent=39 // pred_check_branch
          %716 = sbr.rel (%p714) target = $region68
        $region67: #{tpu_custom_call.1} parent=39 // pred_region
          %s718 = ssub.s32 128, 128
          %719 = vsyncadd %s710, %s718
          %s720 = sadd.s32 %s32, %s31
          %s721 = smul.addr %s720, 128
          %s722 = scalar_lea.hbm %s5, %s721
          %s724 = sshll.u32 %s713, 4
          %s725 = int_to_ptr.vmem [resolvable:$true] %s724
          %727 = dma.vmem_to_hbm [thread:$0]  %s725, 128, %s722, %s710
        $region68: #{tpu_custom_call.1} parent=39 // pred_fallthru
          _
      $region40: #{tpu_custom_call.1} parent=5 // pred_fallthru
        _
      %p728 = scmp.le.s32.totalorder 2, %s21
      // Predicated region
      $region69: #{tpu_custom_call.1} parent=5 // pred_check
        %p729 = pneg %p728
      $region70: #{tpu_custom_call.1} parent=5 // pred_check_branch
        %731 = sbr.rel (%p729) target = $region72
      $region71: #{tpu_custom_call.1} parent=5 // pred_region
        %s732 = ssub.s32 %s21, 2
        // Predicated region
        $region73: #{tpu_custom_call.1} parent=71 // pred_check
          %p733 = pneg %p197
        $region74: #{tpu_custom_call.1} parent=71 // pred_check_branch
          %735 = sbr.rel (%p733) target = $region76
        $region75: #{tpu_custom_call.1} parent=71 // pred_region
          %s736 = sand.u32 %s182, 1
          %s737 = scalar_lea.sflag [#allocation8], %s736
          %s738 = sand.u32 %s182, 1
          %s739 = smul.addr %s738, 8
          %s740 = scalar_lea.vmem [#allocation14], %s739
          %741 = dma.done %s737, 128
        $region76: #{tpu_custom_call.1} parent=71 // pred_fallthru
          _
      $region72: #{tpu_custom_call.1} parent=5 // pred_fallthru
        _
    $region6: #{tpu_custom_call.1} parent=1 // loop_footer
      %s25 = sadd.s32 1, %s21
    $region7: #{tpu_custom_call.1} parent=1 // loop_footer_branch
      %20 = sbr.rel target = $region3
    $region8: #{tpu_custom_call.1} parent=1 // loop_exit
      _
    %742 = vsyncpa [#allocation7], 1
    %s743 = scalar_lea.sflag [#allocation7], 1
    %744 = vsyncpa %s743, 1
    %745 = vsyncpa [#allocation10], 1
    %s746 = scalar_lea.sflag [#allocation10], 1
    %747 = vsyncpa %s746, 1
    %748 = vsyncpa [#allocation13], 1
    %749 = vsyncpa [#allocation8], 1
    %s750 = scalar_lea.sflag [#allocation8], 1
    %751 = vsyncpa %s750, 1

</llo_original>
